<compile_context>
chip_gen: v6e
topology: v6e:2x2x1
jax: 0.10.0
libtpu: 0.0.40
codegen_flags: <defaults>
</compile_context>

<pallas_src>
import functools
import math

import jax
import jax.numpy as jnp
from jax.experimental import pallas as pl
from jax.experimental.pallas import tpu as pltpu


_MASK_VALUE = -1e30            # large negative finite value (avoids inf-inf NaNs)
_VMEM_LIMIT_BYTES = 32 * 1024 * 1024   # explicit budget: fits v7x, lifts v5e default


def _invariant_spec(block_shape, index_map):
    """BlockSpec for a grid-invariant operand: single-buffer it (halves VMEM)."""
    try:
        return pl.BlockSpec(block_shape, index_map, pipeline_mode=pl.Buffered(1))
    except TypeError:   # jax version without pipeline_mode on BlockSpec
        return pl.BlockSpec(block_shape, index_map)


# ---------------------------------------------------------------------------
# Kernel 1: fused QKV projection (bf16 MXU, f32 accumulate, scale folded in Q)
# ---------------------------------------------------------------------------
def qkv_proj_kernel(x_ref, wq_ref, wk_ref, wv_ref, q_ref, k_ref, v_ref, *, scale):
    # x_ref: (1, TS, D) f32; w*_ref: (D, D) bf16; outputs: (1, TS, D) bf16.
    x = x_ref[0].astype(jnp.bfloat16)
    q = jnp.dot(x, wq_ref[...], preferred_element_type=jnp.float32)
    q_ref[0] = (q * scale).astype(q_ref.dtype)           # fold 1/sqrt(d_k) into Q
    k_ref[0] = jnp.dot(x, wk_ref[...],
                       preferred_element_type=jnp.float32).astype(k_ref.dtype)
    v_ref[0] = jnp.dot(x, wv_ref[...],
                       preferred_element_type=jnp.float32).astype(v_ref.dtype)


# ---------------------------------------------------------------------------
# Kernel 2: flash-style causal attention + fused output projection
# grid = (B, num_q_tiles, num_kv_tiles);  kv axis is the reduction ("arbitrary")
# ---------------------------------------------------------------------------
def flash_attn_kernel(q_ref, k_ref, v_ref, wo_ref, o_ref,
                      q_sc, k_sc, v_sc, m_sc, l_sc, acc_sc, *, num_heads):
    qi = pl.program_id(1)
    ki = pl.program_id(2)
    _, tq, D = q_ref.shape
    _, tk, _ = k_ref.shape
    d_k = D // num_heads

    @pl.when(ki == 0)
    def _init():
        m_sc[...] = jnp.full(m_sc.shape, _MASK_VALUE, m_sc.dtype)
        l_sc[...] = jnp.zeros(l_sc.shape, l_sc.dtype)
        acc_sc[...] = jnp.zeros(acc_sc.shape, acc_sc.dtype)
        # Head-split the (pre-scaled) Q tile once per KV sweep: (TQ, D) -> (H, TQ, d_k).
        for h in range(num_heads):
            q_sc[h] = q_ref[0, :, h * d_k:(h + 1) * d_k]

    def _accumulate(masked):
        # Layout copy into head-major scratch (one block copy per K and V).
        for h in range(num_heads):
            k_sc[h] = k_ref[0, :, h * d_k:(h + 1) * d_k]
            v_sc[h] = v_ref[0, :, h * d_k:(h + 1) * d_k]

        # Batched-head score matmul on the MXU (bf16 in, f32 out).
        s = jnp.einsum('hqd,hkd->hqk', q_sc[...], k_sc[...],
                       preferred_element_type=jnp.float32)     # (H, TQ, TK)

        if masked:
            # Diagonal block only: qi*tq == ki*tk, so block-local iotas suffice.
            rows = jax.lax.broadcasted_iota(jnp.int32, (tq, tk), 0)
            cols = jax.lax.broadcasted_iota(jnp.int32, (tq, tk), 1)
            s = jnp.where((cols > rows)[None, :, :], _MASK_VALUE, s)

        # Online softmax update.
        m_prev = m_sc[...]
        m_new = jnp.maximum(m_prev, jnp.max(s, axis=-1, keepdims=True))
        alpha = jnp.exp(m_prev - m_new)
        p = jnp.exp(s - m_new)
        l_sc[...] = alpha * l_sc[...] + jnp.sum(p, axis=-1, keepdims=True)
        acc_sc[...] = alpha * acc_sc[...] + jnp.einsum(
            'hqk,hkd->hqd', p.astype(jnp.bfloat16), v_sc[...],
            preferred_element_type=jnp.float32)
        m_sc[...] = m_new

    # Strictly-below-diagonal blocks: no masking work at all.
    @pl.when(ki < qi)
    def _off_diag():
        _accumulate(masked=False)

    # Diagonal block: mask, accumulate, then finalize (it is the last
    # contributing block for this Q tile).
    @pl.when(ki == qi)
    def _diag_and_finalize():
        _accumulate(masked=True)
        attn = (acc_sc[...] * pl.reciprocal(l_sc[...], approx=True)
                ).astype(jnp.bfloat16)                          # (H, TQ, d_k)
        # Output projection as a sum of per-head matmuls against sublane-aligned
        # row slices of wo -- avoids the lane-offset concatenate of head slices.
        out = jnp.dot(attn[0], wo_ref[0:d_k, :],
                      preferred_element_type=jnp.float32)
        for h in range(1, num_heads):
            out += jnp.dot(attn[h], wo_ref[h * d_k:(h + 1) * d_k, :],
                           preferred_element_type=jnp.float32)
        o_ref[0] = out.astype(o_ref.dtype)


# ---------------------------------------------------------------------------
# Wrapper
# ---------------------------------------------------------------------------
def multihead_self_attention(x, params, *, num_heads, seq_tile=256):
    """Causal multi-head self-attention matching the PyTorch module.

    x: (B, S, D) float32.
    params: {'wq','wk','wv','wo'} pre-transposed so y = x @ w (nn.Linear does x @ W.T).
    """
    B, S, D = x.shape
    assert D % num_heads == 0
    d_k = D // num_heads
    ts = min(seq_tile, S)
    assert S % ts == 0, "sequence length must be divisible by the sequence tile"
    tq = tk = ts
    scale = 1.0 / math.sqrt(d_k)

    # bf16 weights: half the DMA bytes / VMEM; all matmuls accumulate in f32.
    wq = params["wq"].astype(jnp.bfloat16)
    wk = params["wk"].astype(jnp.bfloat16)
    wv = params["wv"].astype(jnp.bfloat16)
    wo = params["wo"].astype(jnp.bfloat16)

    # ---- Kernel 1: QKV projection over (batch, seq-tile) grid -------------
    x_spec = pl.BlockSpec((1, ts, D), lambda b, s: (b, s, 0))
    w_spec2 = _invariant_spec((D, D), lambda b, s: (0, 0))
    q, k, v = pl.pallas_call(
        functools.partial(qkv_proj_kernel, scale=scale),
        out_shape=tuple(jax.ShapeDtypeStruct((B, S, D), jnp.bfloat16)
                        for _ in range(3)),
        grid_spec=pltpu.PrefetchScalarGridSpec(
            num_scalar_prefetch=0,
            grid=(B, S // ts),
            in_specs=[x_spec, w_spec2, w_spec2, w_spec2],
            out_specs=[x_spec, x_spec, x_spec],
        ),
        compiler_params=pltpu.CompilerParams(
            dimension_semantics=("parallel", "parallel"),
            vmem_limit_bytes=_VMEM_LIMIT_BYTES),
    )(x, wq, wk, wv)

    # ---- Kernel 2: flash attention + output projection ---------------------
    num_q = S // tq
    num_k = S // tk
    qo_spec = pl.BlockSpec((1, tq, D), lambda b, qi, ki: (b, qi, 0))
    # Clamp the KV block index to the diagonal: skipped above-diagonal steps
    # re-request the already-resident block, so no extra DMA is issued.
    kv_spec = pl.BlockSpec((1, tk, D),
                           lambda b, qi, ki: (b, jnp.minimum(ki, qi), 0))
    wo_spec = _invariant_spec((D, D), lambda b, qi, ki: (0, 0))
    out = pl.pallas_call(
        functools.partial(flash_attn_kernel, num_heads=num_heads),
        out_shape=jax.ShapeDtypeStruct((B, S, D), x.dtype),
        grid_spec=pltpu.PrefetchScalarGridSpec(
            num_scalar_prefetch=0,
            grid=(B, num_q, num_k),
            in_specs=[
                qo_spec,
                kv_spec,
                kv_spec,
                wo_spec,
            ],
            out_specs=qo_spec,
            scratch_shapes=[
                pltpu.VMEM((num_heads, tq, d_k), jnp.bfloat16),   # head-split Q
                pltpu.VMEM((num_heads, tk, d_k), jnp.bfloat16),   # head-split K
                pltpu.VMEM((num_heads, tk, d_k), jnp.bfloat16),   # head-split V
                pltpu.VMEM((num_heads, tq, 1), jnp.float32),      # running max
                pltpu.VMEM((num_heads, tq, 1), jnp.float32),      # running denom
                pltpu.VMEM((num_heads, tq, d_k), jnp.float32),    # output accum
            ],
        ),
        compiler_params=pltpu.CompilerParams(
            dimension_semantics=("parallel", "parallel", "arbitrary"),
            vmem_limit_bytes=_VMEM_LIMIT_BYTES),
    )(q, k, v, wo)
    return out


# ---------------------------------------------------------------------------
# Pure-JAX f32 reference mirroring the PyTorch forward exactly
# ---------------------------------------------------------------------------
def reference_mhsa(x, params, *, num_heads):
    B, S, D = x.shape
    d_k = D // num_heads
    q = x @ params["wq"]
    k = x @ params["wk"]
    v = x @ params["wv"]
    q = q.reshape(B, S, num_heads, d_k).transpose(0, 2, 1, 3)
    k = k.reshape(B, S, num_heads, d_k).transpose(0, 2, 1, 3)
    v = v.reshape(B, S, num_heads, d_k).transpose(0, 2, 1, 3)
    scores = (q @ jnp.swapaxes(k, -1, -2)) / jnp.sqrt(jnp.float32(d_k))
    mask = jnp.triu(jnp.ones((S, S), dtype=bool), k=1)
    scores = jnp.where(mask, -jnp.inf, scores)
    w = jax.nn.softmax(scores, axis=-1)
    attn = (w @ v).transpose(0, 2, 1, 3).reshape(B, S, D)
    return attn @ params["wo"]


if __name__ == "__main__":
    B, S, D, H = 2, 128, 128, 4   # 128-aligned small shapes (d_k = 32)

    key = jax.random.PRNGKey(0)
    k0, k1, k2, k3, k4 = jax.random.split(key, 5)
    scale_w = 1.0 / math.sqrt(D)
    # nn.Linear stores weight as (out, in) and computes x @ W.T; pre-transpose
    # so the kernel does a plain x @ W.
    params = {
        "wq": (jax.random.normal(k0, (D, D), jnp.float32) * scale_w).T,
        "wk": (jax.random.normal(k1, (D, D), jnp.float32) * scale_w).T,
        "wv": (jax.random.normal(k2, (D, D), jnp.float32) * scale_w).T,
        "wo": (jax.random.normal(k3, (D, D), jnp.float32) * scale_w).T,
    }
    x = jax.random.normal(k4, (B, S, D), jnp.float32)

    out = multihead_self_attention(x, params, num_heads=H)
    out = jax.block_until_ready(out)

    ref = reference_mhsa(x, params, num_heads=H)
    assert out.shape == (B, S, D)
    max_err = float(jnp.max(jnp.abs(out - ref)))
    # bf16 matmuls with f32 accumulation vs. an all-f32 reference.
    assert jnp.allclose(out, ref, atol=5e-2, rtol=5e-2), \
        f"mismatch vs reference, max abs err={max_err}"

    print("KERNEL_OK")
</pallas_src>

<mosaic_0001>
module attributes {stable_mosaic.version = 11 : i64} {
  func.func @qkv_proj_kernel(%arg0: i32, %arg1: i32, %arg2: memref<1x128x128xf32, #tpu.memory_space<vmem>>, %arg3: memref<128x128xbf16, #tpu.memory_space<vmem>>, %arg4: memref<128x128xbf16, #tpu.memory_space<vmem>>, %arg5: memref<128x128xbf16, #tpu.memory_space<vmem>>, %arg6: memref<1x128x128xbf16, #tpu.memory_space<vmem>>, %arg7: memref<1x128x128xbf16, #tpu.memory_space<vmem>>, %arg8: memref<1x128x128xbf16, #tpu.memory_space<vmem>>) attributes {dimension_semantics = [#tpu.dimension_semantics<parallel>, #tpu.dimension_semantics<parallel>], iteration_bounds = array<i64: 2, 1>, scalar_prefetch = 0 : i64, scratch_operands = 0 : i64, tpu.core_type = #tpu.core_type<tc>, window_params = [{transform_indices = @transform_0, window_bounds = array<i64: 1, 128, 128>}, {pipeline_mode = #tpu.pipeline_mode<synchronous>, transform_indices = @transform_1, window_bounds = array<i64: 128, 128>}, {pipeline_mode = #tpu.pipeline_mode<synchronous>, transform_indices = @transform_2, window_bounds = array<i64: 128, 128>}, {pipeline_mode = #tpu.pipeline_mode<synchronous>, transform_indices = @transform_3, window_bounds = array<i64: 128, 128>}, {transform_indices = @transform_4, window_bounds = array<i64: 1, 128, 128>}, {transform_indices = @transform_5, window_bounds = array<i64: 1, 128, 128>}, {transform_indices = @transform_6, window_bounds = array<i64: 1, 128, 128>}]} {
    %c0 = arith.constant 0 : index
    %c0_0 = arith.constant 0 : index
    %c0_1 = arith.constant 0 : index
    %0 = vector.load %arg2[%c0, %c0_0, %c0_1] : memref<1x128x128xf32, #tpu.memory_space<vmem>>, vector<1x128x128xf32>
    %1 = vector.shape_cast %0 : vector<1x128x128xf32> to vector<128x128xf32>
    %2 = arith.truncf %1 : vector<128x128xf32> to vector<128x128xbf16>
    %c0_2 = arith.constant 0 : index
    %c0_3 = arith.constant 0 : index
    %3 = vector.load %arg3[%c0_2, %c0_3] : memref<128x128xbf16, #tpu.memory_space<vmem>>, vector<128x128xbf16>
    %cst = arith.constant dense<0.000000e+00> : vector<128x128xf32>
    %4 = tpu.matmul %2, %3, %cst {dimension_numbers = #tpu.dot_dimension_numbers<[1], [0], [0], [1], [0, 0, 1, 1], [], []>} : vector<128x128xbf16>, vector<128x128xbf16>, vector<128x128xf32> -> vector<128x128xf32>
    %cst_4 = arith.constant 0.176776692 : f32
    %5 = vector.broadcast %cst_4 : f32 to vector<128x128xf32>
    %6 = arith.mulf %4, %5 : vector<128x128xf32>
    %7 = arith.truncf %6 : vector<128x128xf32> to vector<128x128xbf16>
    %c0_5 = arith.constant 0 : index
    %c0_6 = arith.constant 0 : index
    %c0_7 = arith.constant 0 : index
    %8 = vector.load %arg6[%c0_5, %c0_6, %c0_7] : memref<1x128x128xbf16, #tpu.memory_space<vmem>>, vector<1x128x128xbf16>
    %9 = vector.shape_cast %8 : vector<1x128x128xbf16> to vector<128x128xbf16>
    %10 = vector.shape_cast %7 : vector<128x128xbf16> to vector<1x128x128xbf16>
    tpu.vector_store %arg6[%c0_5, %c0_6, %c0_7], %10 {strides = array<i32>} : memref<1x128x128xbf16, #tpu.memory_space<vmem>>, vector<1x128x128xbf16>,
    %c0_8 = arith.constant 0 : index
    %c0_9 = arith.constant 0 : index
    %11 = vector.load %arg4[%c0_8, %c0_9] : memref<128x128xbf16, #tpu.memory_space<vmem>>, vector<128x128xbf16>
    %cst_10 = arith.constant dense<0.000000e+00> : vector<128x128xf32>
    %12 = tpu.matmul %2, %11, %cst_10 {dimension_numbers = #tpu.dot_dimension_numbers<[1], [0], [0], [1], [0, 0, 1, 1], [], []>} : vector<128x128xbf16>, vector<128x128xbf16>, vector<128x128xf32> -> vector<128x128xf32>
    %13 = arith.truncf %12 : vector<128x128xf32> to vector<128x128xbf16>
    %c0_11 = arith.constant 0 : index
    %c0_12 = arith.constant 0 : index
    %c0_13 = arith.constant 0 : index
    %14 = vector.load %arg7[%c0_11, %c0_12, %c0_13] : memref<1x128x128xbf16, #tpu.memory_space<vmem>>, vector<1x128x128xbf16>
    %15 = vector.shape_cast %14 : vector<1x128x128xbf16> to vector<128x128xbf16>
    %16 = vector.shape_cast %13 : vector<128x128xbf16> to vector<1x128x128xbf16>
    tpu.vector_store %arg7[%c0_11, %c0_12, %c0_13], %16 {strides = array<i32>} : memref<1x128x128xbf16, #tpu.memory_space<vmem>>, vector<1x128x128xbf16>,
    %c0_14 = arith.constant 0 : index
    %c0_15 = arith.constant 0 : index
    %17 = vector.load %arg5[%c0_14, %c0_15] : memref<128x128xbf16, #tpu.memory_space<vmem>>, vector<128x128xbf16>
    %cst_16 = arith.constant dense<0.000000e+00> : vector<128x128xf32>
    %18 = tpu.matmul %2, %17, %cst_16 {dimension_numbers = #tpu.dot_dimension_numbers<[1], [0], [0], [1], [0, 0, 1, 1], [], []>} : vector<128x128xbf16>, vector<128x128xbf16>, vector<128x128xf32> -> vector<128x128xf32>
    %19 = arith.truncf %18 : vector<128x128xf32> to vector<128x128xbf16>
    %c0_17 = arith.constant 0 : index
    %c0_18 = arith.constant 0 : index
    %c0_19 = arith.constant 0 : index
    %20 = vector.load %arg8[%c0_17, %c0_18, %c0_19] : memref<1x128x128xbf16, #tpu.memory_space<vmem>>, vector<1x128x128xbf16>
    %21 = vector.shape_cast %20 : vector<1x128x128xbf16> to vector<128x128xbf16>
    %22 = vector.shape_cast %19 : vector<128x128xbf16> to vector<1x128x128xbf16>
    tpu.vector_store %arg8[%c0_17, %c0_18, %c0_19], %22 {strides = array<i32>} : memref<1x128x128xbf16, #tpu.memory_space<vmem>>, vector<1x128x128xbf16>,
    return
  }
  func.func @transform_0(%arg0: i32, %arg1: i32) -> (i32, i32, i32) {
    %c0_i32 = arith.constant 0 : i32
    %c0_i32_0 = arith.constant 0 : i32
    return %arg0, %arg1, %c0_i32 : i32, i32, i32
  }
  func.func @transform_1(%arg0: i32, %arg1: i32) -> (i32, i32) {
    %c0_i32 = arith.constant 0 : i32
    %c0_i32_0 = arith.constant 0 : i32
    %c0_i32_1 = arith.constant 0 : i32
    return %c0_i32, %c0_i32_0 : i32, i32
  }
  func.func @transform_2(%arg0: i32, %arg1: i32) -> (i32, i32) {
    %c0_i32 = arith.constant 0 : i32
    %c0_i32_0 = arith.constant 0 : i32
    %c0_i32_1 = arith.constant 0 : i32
    return %c0_i32, %c0_i32_0 : i32, i32
  }
  func.func @transform_3(%arg0: i32, %arg1: i32) -> (i32, i32) {
    %c0_i32 = arith.constant 0 : i32
    %c0_i32_0 = arith.constant 0 : i32
    %c0_i32_1 = arith.constant 0 : i32
    return %c0_i32, %c0_i32_0 : i32, i32
  }
  func.func @transform_4(%arg0: i32, %arg1: i32) -> (i32, i32, i32) {
    %c0_i32 = arith.constant 0 : i32
    %c0_i32_0 = arith.constant 0 : i32
    return %arg0, %arg1, %c0_i32 : i32, i32, i32
  }
  func.func @transform_5(%arg0: i32, %arg1: i32) -> (i32, i32, i32) {
    %c0_i32 = arith.constant 0 : i32
    %c0_i32_0 = arith.constant 0 : i32
    return %arg0, %arg1, %c0_i32 : i32, i32, i32
  }
  func.func @transform_6(%arg0: i32, %arg1: i32) -> (i32, i32, i32) {
    %c0_i32 = arith.constant 0 : i32
    %c0_i32_0 = arith.constant 0 : i32
    return %arg0, %arg1, %c0_i32 : i32, i32, i32
  }
}

</mosaic_0001>

<llo_original>
// kernel: tpu_custom_call.1
$region0: #{tpu_custom_call.1}
  #allocation0 [shape = 'u32[]', space=smem, size = 0x4, offset = 0x4, fixed_abs, tag = 'smem constant byte address 0x4 - core index']
  #allocation1 [shape = 'u32[144,128]{1,0:T(1,128)}', space=vmem, size = 0x12000, scoped, tag = 'internal scratch']
  %s0 = inlined_call_operand.hbm [shape: f32[2,128,128], index: 0, kind: input, shape index: {}]
  %s1 = inlined_call_operand.hbm [shape: bf16[128,128], index: 1, kind: input, shape index: {}]
  %s2 = inlined_call_operand.hbm [shape: bf16[128,128], index: 2, kind: input, shape index: {}]
  %s3 = inlined_call_operand.hbm [shape: bf16[128,128], index: 3, kind: input, shape index: {}]
  %s4 = inlined_call_operand.hbm [shape: bf16[2,128,128], index: 4, kind: output, shape index: {0}]
  %s5 = inlined_call_operand.hbm [shape: bf16[2,128,128], index: 5, kind: output, shape index: {1}]
  %s6 = inlined_call_operand.hbm [shape: bf16[2,128,128], index: 6, kind: output, shape index: {2}]
  %7 = xla_tuple %s4, %s5, %s6
  %s8 = sld [smem:[#allocation0]]
  $region81: #{tpu_custom_call.1} parent=0
    _
  %s10 = ssub.s32 1, %s8
  %s11 = scalar_select 0, %s10, %s8
  $region1: #{tpu_custom_call.1} parent=0
    #allocation2 [shape = 'u8[131072]{0}', space=vmem, size = 0x20000, scoped, tag = 'input window, operand 0']
    #allocation3 [shape = 's32[2]{0}', space=sflag, size = 0x8, scoped, tag = 'scoped memory for tpu_custom_call.1']
    #allocation4 [shape = 's32[2]{0}', space=sflag, size = 0x8, scoped, tag = 'scoped memory for tpu_custom_call.1']
    #allocation5 [shape = 'u8[32768]{0}', space=vmem, size = 0x8000, scoped, tag = 'input window, operand 1, single buffered']
    #allocation6 [shape = 's32[1]{0}', space=sflag, size = 0x4, scoped, tag = 'scoped memory for tpu_custom_call.1']
    #allocation7 [shape = 'u8[32768]{0}', space=vmem, size = 0x8000, scoped, tag = 'input window, operand 2, single buffered']
    #allocation8 [shape = 'u8[32768]{0}', space=vmem, size = 0x8000, scoped, tag = 'input window, operand 3, single buffered']
    #allocation9 [shape = 's32[1]{0}', space=sflag, size = 0x4, scoped, tag = 'scoped memory for tpu_custom_call.1']
    #allocation10 [shape = 'u8[65536]{0}', space=vmem, size = 0x10000, scoped, tag = 'output window, operand 0']
    #allocation11 [shape = 'u8[65536]{0}', space=vmem, size = 0x10000, scoped, tag = 'output window, operand 1']
    #allocation12 [shape = 's32[2]{0}', space=sflag, size = 0x8, scoped, tag = 'scoped memory for tpu_custom_call.1']
    #allocation13 [shape = 'u8[65536]{0}', space=vmem, size = 0x10000, scoped, tag = 'output window, operand 2']
    %12 = vsyncpa [#allocation3], 0
    %s13 = scalar_lea.sflag [#allocation3], 1
    %14 = vsyncpa %s13, 0
    %15 = vsyncpa [#allocation6], 0
    %16 = vsyncpa [#allocation9], 0
    %17 = vsyncpa [#allocation4], 0
    %s18 = scalar_lea.sflag [#allocation4], 1
    %19 = vsyncpa %s18, 0
    %20 = vsyncpa [#allocation12], 0
    %s21 = scalar_lea.sflag [#allocation12], 1
    %22 = vsyncpa %s21, 0
    loop: start=0, step=1, limit=4
    $region2: #{tpu_custom_call.1} parent=1 // loop_pre_header
      _
    $region3: #{tpu_custom_call.1} parent=1 // loop_header
      %s24 = sphi 0, %s28
      %p25 = scmp.ge.s32.totalorder %s24, 4
      %s31 = sphi 0, %s43
      %s32 = sphi 0, %s39
      %s33 = sphi 0, %s31
      %s34 = sphi 0, %s32
      %s35 = sphi 0, %s33
      %s36 = sphi 0, %s34
      %s48 = sphi 0, %s50
      %s51 = sphi 0, %s48
      %s52 = sphi 0, %s51
      %s68 = sphi 0, %s52
      %s72 = sphi 0, %s72
      %s74 = sphi 0, %s72
      %s75 = sphi 0, %s74
      %s89 = sphi 0, %s75
      %s93 = sphi 0, %s93
      %s95 = sphi 0, %s93
      %s96 = sphi 0, %s95
      %s110 = sphi 0, %s96
      %s114 = sphi 0, %s114
      %s116 = sphi 0, %s114
      %s117 = sphi 0, %s116
      %s131 = sphi 0, %s117
      %s139 = sphi 0, %s141
      %s142 = sphi 0, %s139
      %s143 = sphi 0, %s142
      %s159 = sphi 0, %s143
      %s167 = sphi 0, %s169
      %s170 = sphi 0, %s167
      %s171 = sphi 0, %s170
      %s187 = sphi 0, %s171
      %s195 = sphi 0, %s197
      %s198 = sphi 0, %s195
      %s199 = sphi 0, %s198
      %s215 = sphi 0, %s199
    $region4: #{tpu_custom_call.1} parent=1 // loop_header_branch
      %27 = sbr.rel (%p25) target = $region8
    $region5: #{tpu_custom_call.1} parent=1 // loop_body
      %s29 = ssub.s32 %s24, 1
      %s30 = ssub.s32 %s24, 2
      %s37 = sadd.s32 1, %s32
      %p38 = scmp.ge.s32.totalorder %s37, 1
      %s39 = scalar_select %p38, 0, %s37
      %s40 = sadd.s32 1, %s31
      %s41 = scalar_select %p38, %s40, %s31
      %p42 = scmp.ge.s32.totalorder %s41, 2
      %s43 = scalar_select %p42, 0, %s41
      %s44 = ssub.s32 %s31, %s43
      %s45 = ssub.s32 %s32, %s39
      %s46 = sor.u32 %s44, %s45
      %p47 = scmp.eq.s32.totalorder %s46, 0
      %s49 = sadd.s32 %s48, 1
      %s50 = scalar_select %p47, %s48, %s49
      %p53 = pneg %p47
      %p54 = scmp.eq.s32.totalorder %s24, 1
      %p55 = por %p53, %p54
      %p56 = scmp.ne.s32.totalorder %s48, %s51
      %p57 = scmp.eq.s32.totalorder %s24, 0
      %p58 = por %p56, %p57
      %p59 = scmp.ne.s32.totalorder %s48, %s51
      %p60 = scmp.eq.s32.totalorder %s29, 1
      %p61 = por %p59, %p60
      %p62 = scmp.ne.s32.totalorder %s51, %s52
      %p63 = scmp.eq.s32.totalorder %s29, 0
      %p64 = por %p62, %p63
      %p65 = scmp.ne.s32.totalorder %s51, %s52
      %p66 = scmp.eq.s32.totalorder %s30, 1
      %p67 = por %p65, %p66
      %p69 = scmp.ne.s32.totalorder %s52, %s68
      %p70 = scmp.eq.s32.totalorder %s30, 0
      %p71 = por %p69, %p70
      %s73 = sadd.s32 %s72, 1
      %p76 = scmp.eq.s32.totalorder %s24, 1
      %p77 = scmp.ne.s32.totalorder %s72, %s74
      %p78 = scmp.eq.s32.totalorder %s24, 0
      %p79 = por %p77, %p78
      %p80 = scmp.ne.s32.totalorder %s72, %s74
      %p81 = scmp.eq.s32.totalorder %s29, 1
      %p82 = por %p80, %p81
      %p83 = scmp.ne.s32.totalorder %s74, %s75
      %p84 = scmp.eq.s32.totalorder %s29, 0
      %p85 = por %p83, %p84
      %p86 = scmp.ne.s32.totalorder %s74, %s75
      %p87 = scmp.eq.s32.totalorder %s30, 1
      %p88 = por %p86, %p87
      %p90 = scmp.ne.s32.totalorder %s75, %s89
      %p91 = scmp.eq.s32.totalorder %s30, 0
      %p92 = por %p90, %p91
      %s94 = sadd.s32 %s93, 1
      %p97 = scmp.eq.s32.totalorder %s24, 1
      %p98 = scmp.ne.s32.totalorder %s93, %s95
      %p99 = scmp.eq.s32.totalorder %s24, 0
      %p100 = por %p98, %p99
      %p101 = scmp.ne.s32.totalorder %s93, %s95
      %p102 = scmp.eq.s32.totalorder %s29, 1
      %p103 = por %p101, %p102
      %p104 = scmp.ne.s32.totalorder %s95, %s96
      %p105 = scmp.eq.s32.totalorder %s29, 0
      %p106 = por %p104, %p105
      %p107 = scmp.ne.s32.totalorder %s95, %s96
      %p108 = scmp.eq.s32.totalorder %s30, 1
      %p109 = por %p107, %p108
      %p111 = scmp.ne.s32.totalorder %s96, %s110
      %p112 = scmp.eq.s32.totalorder %s30, 0
      %p113 = por %p111, %p112
      %s115 = sadd.s32 %s114, 1
      %p118 = scmp.eq.s32.totalorder %s24, 1
      %p119 = scmp.ne.s32.totalorder %s114, %s116
      %p120 = scmp.eq.s32.totalorder %s24, 0
      %p121 = por %p119, %p120
      %p122 = scmp.ne.s32.totalorder %s114, %s116
      %p123 = scmp.eq.s32.totalorder %s29, 1
      %p124 = por %p122, %p123
      %p125 = scmp.ne.s32.totalorder %s116, %s117
      %p126 = scmp.eq.s32.totalorder %s29, 0
      %p127 = por %p125, %p126
      %p128 = scmp.ne.s32.totalorder %s116, %s117
      %p129 = scmp.eq.s32.totalorder %s30, 1
      %p130 = por %p128, %p129
      %p132 = scmp.ne.s32.totalorder %s117, %s131
      %p133 = scmp.eq.s32.totalorder %s30, 0
      %p134 = por %p132, %p133
      %s135 = ssub.s32 %s31, %s43
      %s136 = ssub.s32 %s32, %s39
      %s137 = sor.u32 %s135, %s136
      %p138 = scmp.eq.s32.totalorder %s137, 0
      %s140 = sadd.s32 %s139, 1
      %s141 = scalar_select %p138, %s139, %s140
      %p144 = pneg %p138
      %p145 = scmp.eq.s32.totalorder %s24, 1
      %p146 = por %p144, %p145
      %p147 = scmp.ne.s32.totalorder %s139, %s142
      %p148 = scmp.eq.s32.totalorder %s24, 0
      %p149 = por %p147, %p148
      %p150 = scmp.ne.s32.totalorder %s139, %s142
      %p151 = scmp.eq.s32.totalorder %s29, 1
      %p152 = por %p150, %p151
      %p153 = scmp.ne.s32.totalorder %s142, %s143
      %p154 = scmp.eq.s32.totalorder %s29, 0
      %p155 = por %p153, %p154
      %p156 = scmp.ne.s32.totalorder %s142, %s143
      %p157 = scmp.eq.s32.totalorder %s30, 1
      %p158 = por %p156, %p157
      %p160 = scmp.ne.s32.totalorder %s143, %s159
      %p161 = scmp.eq.s32.totalorder %s30, 0
      %p162 = por %p160, %p161
      %s163 = ssub.s32 %s31, %s43
      %s164 = ssub.s32 %s32, %s39
      %s165 = sor.u32 %s163, %s164
      %p166 = scmp.eq.s32.totalorder %s165, 0
      %s168 = sadd.s32 %s167, 1
      %s169 = scalar_select %p166, %s167, %s168
      %p172 = pneg %p166
      %p173 = scmp.eq.s32.totalorder %s24, 1
      %p174 = por %p172, %p173
      %p175 = scmp.ne.s32.totalorder %s167, %s170
      %p176 = scmp.eq.s32.totalorder %s24, 0
      %p177 = por %p175, %p176
      %p178 = scmp.ne.s32.totalorder %s167, %s170
      %p179 = scmp.eq.s32.totalorder %s29, 1
      %p180 = por %p178, %p179
      %p181 = scmp.ne.s32.totalorder %s170, %s171
      %p182 = scmp.eq.s32.totalorder %s29, 0
      %p183 = por %p181, %p182
      %p184 = scmp.ne.s32.totalorder %s170, %s171
      %p185 = scmp.eq.s32.totalorder %s30, 1
      %p186 = por %p184, %p185
      %p188 = scmp.ne.s32.totalorder %s171, %s187
      %p189 = scmp.eq.s32.totalorder %s30, 0
      %p190 = por %p188, %p189
      %s191 = ssub.s32 %s31, %s43
      %s192 = ssub.s32 %s32, %s39
      %s193 = sor.u32 %s191, %s192
      %p194 = scmp.eq.s32.totalorder %s193, 0
      %s196 = sadd.s32 %s195, 1
      %s197 = scalar_select %p194, %s195, %s196
      %p200 = pneg %p194
      %p201 = scmp.eq.s32.totalorder %s24, 1
      %p202 = por %p200, %p201
      %p203 = scmp.ne.s32.totalorder %s195, %s198
      %p204 = scmp.eq.s32.totalorder %s24, 0
      %p205 = por %p203, %p204
      %p206 = scmp.ne.s32.totalorder %s195, %s198
      %p207 = scmp.eq.s32.totalorder %s29, 1
      %p208 = por %p206, %p207
      %p209 = scmp.ne.s32.totalorder %s198, %s199
      %p210 = scmp.eq.s32.totalorder %s29, 0
      %p211 = por %p209, %p210
      %p212 = scmp.ne.s32.totalorder %s198, %s199
      %p213 = scmp.eq.s32.totalorder %s30, 1
      %p214 = por %p212, %p213
      %p216 = scmp.ne.s32.totalorder %s199, %s215
      %p217 = scmp.eq.s32.totalorder %s30, 0
      %p218 = por %p216, %p217
      %p219 = scmp.le.s32.totalorder 1, %s24
      %p220 = scmp.lt.s32.totalorder %s24, 3
      %p221 = pnand %p219, %p220
      %p222 = pneg %p221
      // Predicated region
      $region9: #{tpu_custom_call.1} parent=5 // pred_check
        _
      $region10: #{tpu_custom_call.1} parent=5 // pred_check_branch
        %224 = sbr.rel (%p221) target = $region12
      $region11: #{tpu_custom_call.1} parent=5 // pred_region
        %s225 = ssub.s32 %s24, 1
        // Predicated region
        $region13: #{tpu_custom_call.1} parent=11 // pred_check
          %p226 = pneg %p85
        $region14: #{tpu_custom_call.1} parent=11 // pred_check_branch
          %228 = sbr.rel (%p226) target = $region16
        $region15: #{tpu_custom_call.1} parent=11 // pred_region
          %s230 = ssub.s32 1024, 1024
          %231 = vsyncadd [#allocation6], %s230
          %s232 = sshll.u32 [#allocation5], 4
          %s233 = int_to_ptr.vmem [resolvable:$true] %s232
          %238 = dma.hbm_to_vmem [thread:$0]  %s1, 1024, %s233, [#allocation6], 64, 64, 4
        $region16: #{tpu_custom_call.1} parent=11 // pred_fallthru
          _
        // Predicated region
        $region17: #{tpu_custom_call.1} parent=11 // pred_check
          %p239 = pneg %p106
        $region18: #{tpu_custom_call.1} parent=11 // pred_check_branch
          %241 = sbr.rel (%p239) target = $region20
        $region19: #{tpu_custom_call.1} parent=11 // pred_region
          %s243 = ssub.s32 1024, 1024
          %244 = vsyncadd [#allocation6], %s243
          %s245 = sshll.u32 [#allocation7], 4
          %s246 = int_to_ptr.vmem [resolvable:$true] %s245
          %251 = dma.hbm_to_vmem [thread:$0]  %s2, 1024, %s246, [#allocation6], 64, 64, 4
        $region20: #{tpu_custom_call.1} parent=11 // pred_fallthru
          _
        // Predicated region
        $region21: #{tpu_custom_call.1} parent=11 // pred_check
          %p252 = pneg %p127
        $region22: #{tpu_custom_call.1} parent=11 // pred_check_branch
          %254 = sbr.rel (%p252) target = $region24
        $region23: #{tpu_custom_call.1} parent=11 // pred_region
          %s256 = ssub.s32 1024, 1024
          %257 = vsyncadd [#allocation9], %s256
          %s258 = sshll.u32 [#allocation8], 4
          %s259 = int_to_ptr.vmem [resolvable:$true] %s258
          %264 = dma.hbm_to_vmem [thread:$0]  %s3, 1024, %s259, [#allocation9], 64, 64, 4
        $region24: #{tpu_custom_call.1} parent=11 // pred_fallthru
          _
      $region12: #{tpu_custom_call.1} parent=5 // pred_fallthru
        _
      %p265 = scmp.lt.s32.totalorder %s24, 2
      // Predicated region
      $region25: #{tpu_custom_call.1} parent=5 // pred_check
        %p266 = pneg %p265
      $region26: #{tpu_custom_call.1} parent=5 // pred_check_branch
        %268 = sbr.rel (%p266) target = $region28
      $region27: #{tpu_custom_call.1} parent=5 // pred_region
        // Predicated region
        $region29: #{tpu_custom_call.1} parent=27 // pred_check
          %p269 = pneg %p58
        $region30: #{tpu_custom_call.1} parent=27 // pred_check_branch
          %271 = sbr.rel (%p269) target = $region32
        $region31: #{tpu_custom_call.1} parent=27 // pred_region
          %s272 = sand.u32 %s48, 1
          %s273 = scalar_lea.sflag [#allocation3], %s272
          %s274 = sand.u32 %s48, 1
          %s275 = smul.addr %s274, 128
          %s276 = scalar_lea.vmem [#allocation2], %s275
          %s277 = smul.u32 16, %s32
          %s279 = ssub.s32 2048, 2048
          %280 = vsyncadd %s273, %s279
          %s281 = smul.addr %s31, 16
          %s282 = sadd.s32 %s277, %s281
          %s283 = smul.addr %s282, 128
          %s284 = scalar_lea.hbm %s0, %s283
          %s285 = sshll.u32 %s276, 4
          %s286 = int_to_ptr.vmem [resolvable:$true] %s285
          %291 = dma.hbm_to_vmem [thread:$0]  %s284, 2048, %s286, %s273, 128, 128, 8
        $region32: #{tpu_custom_call.1} parent=27 // pred_fallthru
          _
      $region28: #{tpu_custom_call.1} parent=5 // pred_fallthru
        _
      %p292 = scmp.le.s32.totalorder 1, %s24
      %p293 = scmp.lt.s32.totalorder %s24, 3
      %p294 = pnand %p292, %p293
      %p295 = pneg %p294
      // Predicated region
      $region33: #{tpu_custom_call.1} parent=5 // pred_check
        _
      $region34: #{tpu_custom_call.1} parent=5 // pred_check_branch
        %297 = sbr.rel (%p294) target = $region36
      $region35: #{tpu_custom_call.1} parent=5 // pred_region
        %s298 = ssub.s32 %s24, 1
        %s299 = sand.u32 %s51, 1
        %s300 = scalar_lea.sflag [#allocation3], %s299
        %s301 = sand.u32 %s51, 1
        %s302 = smul.addr %s301, 128
        %s303 = scalar_lea.vmem [#allocation2], %s302
        // Predicated region
        $region37: #{tpu_custom_call.1} parent=35 // pred_check
          %p304 = pneg %p64
        $region38: #{tpu_custom_call.1} parent=35 // pred_check_branch
          %306 = sbr.rel (%p304) target = $region40
        $region39: #{tpu_custom_call.1} parent=35 // pred_region
          %307 = dma.done %s300, 2048
        $region40: #{tpu_custom_call.1} parent=35 // pred_fallthru
          _
        // Predicated region
        $region41: #{tpu_custom_call.1} parent=35 // pred_check
          %p308 = pneg %p85
        $region42: #{tpu_custom_call.1} parent=35 // pred_check_branch
          %310 = sbr.rel (%p308) target = $region44
        $region43: #{tpu_custom_call.1} parent=35 // pred_region
          %311 = dma.done [#allocation6], 1024
        $region44: #{tpu_custom_call.1} parent=35 // pred_fallthru
          _
        // Predicated region
        $region45: #{tpu_custom_call.1} parent=35 // pred_check
          %p312 = pneg %p106
        $region46: #{tpu_custom_call.1} parent=35 // pred_check_branch
          %314 = sbr.rel (%p312) target = $region48
        $region47: #{tpu_custom_call.1} parent=35 // pred_region
          %315 = dma.done [#allocation6], 1024
        $region48: #{tpu_custom_call.1} parent=35 // pred_fallthru
          _
        // Predicated region
        $region49: #{tpu_custom_call.1} parent=35 // pred_check
          %p316 = pneg %p127
        $region50: #{tpu_custom_call.1} parent=35 // pred_check_branch
          %318 = sbr.rel (%p316) target = $region52
        $region51: #{tpu_custom_call.1} parent=35 // pred_region
          %319 = dma.done [#allocation9], 1024
        $region52: #{tpu_custom_call.1} parent=35 // pred_fallthru
          _
        %s320 = sand.u32 %s51, 1
        %s321 = scalar_lea.sflag [#allocation3], %s320
        %s322 = sand.u32 %s51, 1
        %s323 = smul.addr %s322, 128
        %s324 = scalar_lea.vmem [#allocation2], %s323
        %p325 = pneg %p64
        %p326 = pneg %p61
        %p327 = pneg %p85
        %p328 = pneg %p82
        %p329 = pneg %p106
        %p330 = pneg %p103
        %p331 = pneg %p127
        %p332 = pneg %p124
        %p333 = pneg %p155
        %p334 = pneg %p152
        %s335 = sand.u32 %s142, 1
        %s336 = scalar_lea.sflag [#allocation4], %s335
        %s337 = sand.u32 %s142, 1
        %s338 = smul.addr %s337, 64
        %s339 = scalar_lea.vmem [#allocation10], %s338
        %p340 = pneg %p183
        %p341 = pneg %p180
        %s342 = sand.u32 %s29, 1
        %s343 = scalar_lea.sflag [#allocation12], %s342
        %s344 = sand.u32 %s170, 1
        %s345 = smul.addr %s344, 64
        %s346 = scalar_lea.vmem [#allocation11], %s345
        %p347 = pneg %p211
        %p348 = pneg %p208
        %s349 = sand.u32 %s29, 1
        %s350 = scalar_lea.sflag [#allocation12], %s349
        %s351 = sand.u32 %s198, 1
        %s352 = smul.addr %s351, 64
        %s353 = scalar_lea.vmem [#allocation13], %s352
        %s354 = smul.u32 16, %s34
        %s355 = smul.u32 16, %s34
        %s356 = smul.u32 16, %s34
        %s357 = smul.u32 16, %s34
        %v359 = vld [vmem:[%s303] sm:$0xff]
        %v360 = vld [vmem:[%s303 + $0x8] sm:$0xff]
        %v361 = vld [vmem:[%s303 + $0x10] sm:$0xff]
        %v362 = vld [vmem:[%s303 + $0x18] sm:$0xff]
        %v363 = vld [vmem:[%s303 + $0x20] sm:$0xff]
        %v364 = vld [vmem:[%s303 + $0x28] sm:$0xff]
        %v365 = vld [vmem:[%s303 + $0x30] sm:$0xff]
        %v366 = vld [vmem:[%s303 + $0x38] sm:$0xff]
        %v367 = vld [vmem:[%s303 + $0x40] sm:$0xff]
        %v368 = vld [vmem:[%s303 + $0x48] sm:$0xff]
        %v369 = vld [vmem:[%s303 + $0x50] sm:$0xff]
        %v370 = vld [vmem:[%s303 + $0x58] sm:$0xff]
        %v371 = vld [vmem:[%s303 + $0x60] sm:$0xff]
        %v372 = vld [vmem:[%s303 + $0x68] sm:$0xff]
        %v373 = vld [vmem:[%s303 + $0x70] sm:$0xff]
        %v374 = vld [vmem:[%s303 + $0x78] sm:$0xff]
        %v375 = vpack.c.bf16 %v360, %v359
        %v376 = vpack.c.bf16 %v362, %v361
        %v377 = vpack.c.bf16 %v364, %v363
        %v378 = vpack.c.bf16 %v366, %v365
        %v379 = vpack.c.bf16 %v368, %v367
        %v380 = vpack.c.bf16 %v370, %v369
        %v381 = vpack.c.bf16 %v372, %v371
        %v382 = vpack.c.bf16 %v374, %v373
        %v383 = vld [vmem:[#allocation5] sm:$0xf]
        %v384 = vld [vmem:[#allocation5 + $0x4] sm:$0xf]
        %v385 = vld [vmem:[#allocation5 + $0x8] sm:$0xf]
        %v386 = vld [vmem:[#allocation5 + $0xc] sm:$0xf]
        %v387 = vld [vmem:[#allocation5 + $0x10] sm:$0xf]
        %v388 = vld [vmem:[#allocation5 + $0x14] sm:$0xf]
        %v389 = vld [vmem:[#allocation5 + $0x18] sm:$0xf]
        %v390 = vld [vmem:[#allocation5 + $0x1c] sm:$0xf]
        %v391 = vld [vmem:[#allocation5 + $0x20] sm:$0xf]
        %v392 = vld [vmem:[#allocation5 + $0x24] sm:$0xf]
        %v393 = vld [vmem:[#allocation5 + $0x28] sm:$0xf]
        %v394 = vld [vmem:[#allocation5 + $0x2c] sm:$0xf]
        %v395 = vld [vmem:[#allocation5 + $0x30] sm:$0xf]
        %v396 = vld [vmem:[#allocation5 + $0x34] sm:$0xf]
        %v397 = vld [vmem:[#allocation5 + $0x38] sm:$0xf]
        %v398 = vld [vmem:[#allocation5 + $0x3c] sm:$0xf]
        %v415 = vunpack.c.l.b16 %v383
        %v416 = vunpack.c.l.b16 %v384
        %v417 = vunpack.c.l.b16 %v385
        %v418 = vunpack.c.l.b16 %v386
        %v419 = vunpack.c.l.b16 %v387
        %v420 = vunpack.c.l.b16 %v388
        %v421 = vunpack.c.l.b16 %v389
        %v422 = vunpack.c.l.b16 %v390
        %v423 = vunpack.c.l.b16 %v391
        %v424 = vunpack.c.l.b16 %v392
        %v425 = vunpack.c.l.b16 %v393
        %v426 = vunpack.c.l.b16 %v394
        %v427 = vunpack.c.l.b16 %v395
        %v428 = vunpack.c.l.b16 %v396
        %v429 = vunpack.c.l.b16 %v397
        %v430 = vunpack.c.l.b16 %v398
        %v431 = vpack.c.b16 %v416, %v415
        %v432 = vpack.c.b16 %v418, %v417
        %v433 = vpack.c.b16 %v420, %v419
        %v434 = vpack.c.b16 %v422, %v421
        %v435 = vpack.c.b16 %v424, %v423
        %v436 = vpack.c.b16 %v426, %v425
        %v437 = vpack.c.b16 %v428, %v427
        %v438 = vpack.c.b16 %v430, %v429
        %447 = vmatprep.subr.bf16.mxu0 0
        %448 = vmatpush1.bf16.msra.mxu0 %v438
        %449 = vmatprep.subr.bf16.mxu0 0
        %450 = vmatpush1.bf16.msra.mxu0 %v437
        %451 = vmatprep.subr.bf16.mxu0 0
        %452 = vmatpush1.bf16.msra.mxu0 %v436
        %453 = vmatprep.subr.bf16.mxu0 0
        %454 = vmatpush1.bf16.msra.mxu0 %v435
        %455 = vmatprep.subr.bf16.mxu0 0
        %456 = vmatpush1.bf16.msra.mxu0 %v434
        %457 = vmatprep.subr.bf16.mxu0 0
        %458 = vmatpush1.bf16.msra.mxu0 %v433
        %459 = vmatprep.subr.bf16.mxu0 0
        %460 = vmatpush1.bf16.msra.mxu0 %v432
        %461 = vmatprep.subr.bf16.mxu0 0
        %462 = vmatpush1.bf16.msra.mxu0 %v431
        %463 = vmatprep.subr.bf16.mxu0 0
        %464 = vmatpush2.bf16.msra.mxu0 0
        %465 = vmatprep.subr.bf16.mxu0 0
        %466 = vmatpush2.bf16.msra.mxu0 0
        %467 = vmatprep.subr.bf16.mxu0 0
        %468 = vmatpush2.bf16.msra.mxu0 0
        %469 = vmatprep.subr.bf16.mxu0 0
        %470 = vmatpush2.bf16.msra.mxu0 0
        %471 = vmatprep.subr.bf16.mxu0 0
        %472 = vmatpush2.bf16.msra.mxu0 0
        %473 = vmatprep.subr.bf16.mxu0 0
        %474 = vmatpush2.bf16.msra.mxu0 0
        %475 = vmatprep.subr.bf16.mxu0 0
        %476 = vmatpush2.bf16.msra.mxu0 0
        %477 = vmatprep.subr.bf16.mxu0 0
        %478 = vmatpush2.bf16.msra.mxu0 0
        %479 = vmatprep.mubr.bf16.mxu0 0
        %480 = vmatmul.mubr.bf16.gmra.mxu0 %v375
        %v481 = vpop.f32.mrf.mxu0
        %v482 = vadd.f32 0.0, %v481
        %v483 = vpop.f32.mrf.mxu0
        %v484 = vpop.f32.mrf.mxu0
        %v485 = vadd.f32 0.0, %v484
        %v486 = vpop.f32.mrf.mxu0
        %487 = vmatprep.mubr.bf16.mxu0 0
        %488 = vmatmul.mubr.bf16.gmra.mxu0 %v376
        %v489 = vpop.f32.mrf.mxu0
        %v490 = vadd.f32 0.0, %v489
        %v491 = vpop.f32.mrf.mxu0
        %v492 = vpop.f32.mrf.mxu0
        %v493 = vadd.f32 0.0, %v492
        %v494 = vpop.f32.mrf.mxu0
        %495 = vmatprep.mubr.bf16.mxu0 0
        %496 = vmatmul.mubr.bf16.gmra.mxu0 %v377
        %v497 = vpop.f32.mrf.mxu0
        %v498 = vadd.f32 0.0, %v497
        %v499 = vpop.f32.mrf.mxu0
        %v500 = vpop.f32.mrf.mxu0
        %v501 = vadd.f32 0.0, %v500
        %v502 = vpop.f32.mrf.mxu0
        %503 = vmatprep.mubr.bf16.mxu0 0
        %504 = vmatmul.mubr.bf16.gmra.mxu0 %v378
        %v505 = vpop.f32.mrf.mxu0
        %v506 = vadd.f32 0.0, %v505
        %v507 = vpop.f32.mrf.mxu0
        %v508 = vpop.f32.mrf.mxu0
        %v509 = vadd.f32 0.0, %v508
        %v510 = vpop.f32.mrf.mxu0
        %511 = vmatprep.mubr.bf16.mxu0 0
        %512 = vmatmul.mubr.bf16.gmra.mxu0 %v379
        %v513 = vpop.f32.mrf.mxu0
        %v514 = vadd.f32 0.0, %v513
        %v515 = vpop.f32.mrf.mxu0
        %v516 = vpop.f32.mrf.mxu0
        %v517 = vadd.f32 0.0, %v516
        %v518 = vpop.f32.mrf.mxu0
        %519 = vmatprep.mubr.bf16.mxu0 0
        %520 = vmatmul.mubr.bf16.gmra.mxu0 %v380
        %v521 = vpop.f32.mrf.mxu0
        %v522 = vadd.f32 0.0, %v521
        %v523 = vpop.f32.mrf.mxu0
        %v524 = vpop.f32.mrf.mxu0
        %v525 = vadd.f32 0.0, %v524
        %v526 = vpop.f32.mrf.mxu0
        %527 = vmatprep.mubr.bf16.mxu0 0
        %528 = vmatmul.mubr.bf16.gmra.mxu0 %v381
        %v529 = vpop.f32.mrf.mxu0
        %v530 = vadd.f32 0.0, %v529
        %v531 = vpop.f32.mrf.mxu0
        %v532 = vpop.f32.mrf.mxu0
        %v533 = vadd.f32 0.0, %v532
        %v534 = vpop.f32.mrf.mxu0
        %535 = vmatprep.mubr.bf16.mxu0 0
        %536 = vmatmul.mubr.bf16.gmra.mxu0 %v382
        %v537 = vpop.f32.mrf.mxu0
        %v538 = vadd.f32 0.0, %v537
        %v539 = vpop.f32.mrf.mxu0
        %v540 = vpop.f32.mrf.mxu0
        %v541 = vadd.f32 0.0, %v540
        %v542 = vpop.f32.mrf.mxu0
        %543 = vdwg.mxu0
        %v544 = vmul.f32 %v482, 0.17677669
        %v545 = vmul.f32 %v485, 0.17677669
        %v546 = vmul.f32 %v490, 0.17677669
        %v547 = vmul.f32 %v493, 0.17677669
        %v548 = vmul.f32 %v498, 0.17677669
        %v549 = vmul.f32 %v501, 0.17677669
        %v550 = vmul.f32 %v506, 0.17677669
        %v551 = vmul.f32 %v509, 0.17677669
        %v552 = vmul.f32 %v514, 0.17677669
        %v553 = vmul.f32 %v517, 0.17677669
        %v554 = vmul.f32 %v522, 0.17677669
        %v555 = vmul.f32 %v525, 0.17677669
        %v556 = vmul.f32 %v530, 0.17677669
        %v557 = vmul.f32 %v533, 0.17677669
        %v558 = vmul.f32 %v538, 0.17677669
        %v559 = vmul.f32 %v541, 0.17677669
        %v560 = vpack.c.bf16 %v545, %v544
        %v561 = vpack.c.bf16 %v547, %v546
        %v562 = vpack.c.bf16 %v549, %v548
        %v563 = vpack.c.bf16 %v551, %v550
        %v564 = vpack.c.bf16 %v553, %v552
        %v565 = vpack.c.bf16 %v555, %v554
        %v566 = vpack.c.bf16 %v557, %v556
        %v567 = vpack.c.bf16 %v559, %v558
        %v576 = vunpack.c.l.b16 %v560
        %v577 = vunpack.c.h.b16 %v560
        %v578 = vunpack.c.l.b16 %v561
        %v579 = vunpack.c.h.b16 %v561
        %v580 = vunpack.c.l.b16 %v562
        %v581 = vunpack.c.h.b16 %v562
        %v582 = vunpack.c.l.b16 %v563
        %v583 = vunpack.c.h.b16 %v563
        %v584 = vunpack.c.l.b16 %v564
        %v585 = vunpack.c.h.b16 %v564
        %v586 = vunpack.c.l.b16 %v565
        %v587 = vunpack.c.h.b16 %v565
        %v588 = vunpack.c.l.b16 %v566
        %v589 = vunpack.c.h.b16 %v566
        %v590 = vunpack.c.l.b16 %v567
        %v591 = vunpack.c.h.b16 %v567
        %v592 = vpack.c.b16 %v576, %v576
        %v593 = vpack.c.b16 %v577, %v577
        %v594 = vpack.c.b16 %v578, %v578
        %v595 = vpack.c.b16 %v579, %v579
        %v596 = vpack.c.b16 %v580, %v580
        %v597 = vpack.c.b16 %v581, %v581
        %v598 = vpack.c.b16 %v582, %v582
        %v599 = vpack.c.b16 %v583, %v583
        %v600 = vpack.c.b16 %v584, %v584
        %v601 = vpack.c.b16 %v585, %v585
        %v602 = vpack.c.b16 %v586, %v586
        %v603 = vpack.c.b16 %v587, %v587
        %v604 = vpack.c.b16 %v588, %v588
        %v605 = vpack.c.b16 %v589, %v589
        %v606 = vpack.c.b16 %v590, %v590
        %v607 = vpack.c.b16 %v591, %v591
        %624 = vst [vmem:[%s339] sm:$0xf] %v592
        %625 = vst [vmem:[%s339 + $0x4] sm:$0xf] %v593
        %626 = vst [vmem:[%s339 + $0x8] sm:$0xf] %v594
        %627 = vst [vmem:[%s339 + $0xc] sm:$0xf] %v595
        %628 = vst [vmem:[%s339 + $0x10] sm:$0xf] %v596
        %629 = vst [vmem:[%s339 + $0x14] sm:$0xf] %v597
        %630 = vst [vmem:[%s339 + $0x18] sm:$0xf] %v598
        %631 = vst [vmem:[%s339 + $0x1c] sm:$0xf] %v599
        %632 = vst [vmem:[%s339 + $0x20] sm:$0xf] %v600
        %633 = vst [vmem:[%s339 + $0x24] sm:$0xf] %v601
        %634 = vst [vmem:[%s339 + $0x28] sm:$0xf] %v602
        %635 = vst [vmem:[%s339 + $0x2c] sm:$0xf] %v603
        %636 = vst [vmem:[%s339 + $0x30] sm:$0xf] %v604
        %637 = vst [vmem:[%s339 + $0x34] sm:$0xf] %v605
        %638 = vst [vmem:[%s339 + $0x38] sm:$0xf] %v606
        %639 = vst [vmem:[%s339 + $0x3c] sm:$0xf] %v607
        %v640 = vld [vmem:[#allocation7] sm:$0xf]
        %v641 = vld [vmem:[#allocation7 + $0x4] sm:$0xf]
        %v642 = vld [vmem:[#allocation7 + $0x8] sm:$0xf]
        %v643 = vld [vmem:[#allocation7 + $0xc] sm:$0xf]
        %v644 = vld [vmem:[#allocation7 + $0x10] sm:$0xf]
        %v645 = vld [vmem:[#allocation7 + $0x14] sm:$0xf]
        %v646 = vld [vmem:[#allocation7 + $0x18] sm:$0xf]
        %v647 = vld [vmem:[#allocation7 + $0x1c] sm:$0xf]
        %v648 = vld [vmem:[#allocation7 + $0x20] sm:$0xf]
        %v649 = vld [vmem:[#allocation7 + $0x24] sm:$0xf]
        %v650 = vld [vmem:[#allocation7 + $0x28] sm:$0xf]
        %v651 = vld [vmem:[#allocation7 + $0x2c] sm:$0xf]
        %v652 = vld [vmem:[#allocation7 + $0x30] sm:$0xf]
        %v653 = vld [vmem:[#allocation7 + $0x34] sm:$0xf]
        %v654 = vld [vmem:[#allocation7 + $0x38] sm:$0xf]
        %v655 = vld [vmem:[#allocation7 + $0x3c] sm:$0xf]
        %v672 = vunpack.c.l.b16 %v640
        %v673 = vunpack.c.l.b16 %v641
        %v674 = vunpack.c.l.b16 %v642
        %v675 = vunpack.c.l.b16 %v643
        %v676 = vunpack.c.l.b16 %v644
        %v677 = vunpack.c.l.b16 %v645
        %v678 = vunpack.c.l.b16 %v646
        %v679 = vunpack.c.l.b16 %v647
        %v680 = vunpack.c.l.b16 %v648
        %v681 = vunpack.c.l.b16 %v649
        %v682 = vunpack.c.l.b16 %v650
        %v683 = vunpack.c.l.b16 %v651
        %v684 = vunpack.c.l.b16 %v652
        %v685 = vunpack.c.l.b16 %v653
        %v686 = vunpack.c.l.b16 %v654
        %v687 = vunpack.c.l.b16 %v655
        %v688 = vpack.c.b16 %v673, %v672
        %v689 = vpack.c.b16 %v675, %v674
        %v690 = vpack.c.b16 %v677, %v676
        %v691 = vpack.c.b16 %v679, %v678
        %v692 = vpack.c.b16 %v681, %v680
        %v693 = vpack.c.b16 %v683, %v682
        %v694 = vpack.c.b16 %v685, %v684
        %v695 = vpack.c.b16 %v687, %v686
        %704 = vmatprep.subr.bf16.mxu0 0
        %705 = vmatpush1.bf16.msra.mxu0 %v695
        %706 = vmatprep.subr.bf16.mxu0 0
        %707 = vmatpush1.bf16.msra.mxu0 %v694
        %708 = vmatprep.subr.bf16.mxu0 0
        %709 = vmatpush1.bf16.msra.mxu0 %v693
        %710 = vmatprep.subr.bf16.mxu0 0
        %711 = vmatpush1.bf16.msra.mxu0 %v692
        %712 = vmatprep.subr.bf16.mxu0 0
        %713 = vmatpush1.bf16.msra.mxu0 %v691
        %714 = vmatprep.subr.bf16.mxu0 0
        %715 = vmatpush1.bf16.msra.mxu0 %v690
        %716 = vmatprep.subr.bf16.mxu0 0
        %717 = vmatpush1.bf16.msra.mxu0 %v689
        %718 = vmatprep.subr.bf16.mxu0 0
        %719 = vmatpush1.bf16.msra.mxu0 %v688
        %720 = vmatprep.subr.bf16.mxu0 0
        %721 = vmatpush2.bf16.msra.mxu0 0
        %722 = vmatprep.subr.bf16.mxu0 0
        %723 = vmatpush2.bf16.msra.mxu0 0
        %724 = vmatprep.subr.bf16.mxu0 0
        %725 = vmatpush2.bf16.msra.mxu0 0
        %726 = vmatprep.subr.bf16.mxu0 0
        %727 = vmatpush2.bf16.msra.mxu0 0
        %728 = vmatprep.subr.bf16.mxu0 0
        %729 = vmatpush2.bf16.msra.mxu0 0
        %730 = vmatprep.subr.bf16.mxu0 0
        %731 = vmatpush2.bf16.msra.mxu0 0
        %732 = vmatprep.subr.bf16.mxu0 0
        %733 = vmatpush2.bf16.msra.mxu0 0
        %734 = vmatprep.subr.bf16.mxu0 0
        %735 = vmatpush2.bf16.msra.mxu0 0
        %736 = vmatprep.mubr.bf16.mxu0 0
        %737 = vmatmul.mubr.bf16.gmra.mxu0 %v375
        %v738 = vpop.f32.mrf.mxu0
        %v739 = vadd.f32 0.0, %v738
        %v740 = vpop.f32.mrf.mxu0
        %v741 = vpop.f32.mrf.mxu0
        %v742 = vadd.f32 0.0, %v741
        %v743 = vpop.f32.mrf.mxu0
        %744 = vmatprep.mubr.bf16.mxu0 0
        %745 = vmatmul.mubr.bf16.gmra.mxu0 %v376
        %v746 = vpop.f32.mrf.mxu0
        %v747 = vadd.f32 0.0, %v746
        %v748 = vpop.f32.mrf.mxu0
        %v749 = vpop.f32.mrf.mxu0
        %v750 = vadd.f32 0.0, %v749
        %v751 = vpop.f32.mrf.mxu0
        %752 = vmatprep.mubr.bf16.mxu0 0
        %753 = vmatmul.mubr.bf16.gmra.mxu0 %v377
        %v754 = vpop.f32.mrf.mxu0
        %v755 = vadd.f32 0.0, %v754
        %v756 = vpop.f32.mrf.mxu0
        %v757 = vpop.f32.mrf.mxu0
        %v758 = vadd.f32 0.0, %v757
        %v759 = vpop.f32.mrf.mxu0
        %760 = vmatprep.mubr.bf16.mxu0 0
        %761 = vmatmul.mubr.bf16.gmra.mxu0 %v378
        %v762 = vpop.f32.mrf.mxu0
        %v763 = vadd.f32 0.0, %v762
        %v764 = vpop.f32.mrf.mxu0
        %v765 = vpop.f32.mrf.mxu0
        %v766 = vadd.f32 0.0, %v765
        %v767 = vpop.f32.mrf.mxu0
        %768 = vmatprep.mubr.bf16.mxu0 0
        %769 = vmatmul.mubr.bf16.gmra.mxu0 %v379
        %v770 = vpop.f32.mrf.mxu0
        %v771 = vadd.f32 0.0, %v770
        %v772 = vpop.f32.mrf.mxu0
        %v773 = vpop.f32.mrf.mxu0
        %v774 = vadd.f32 0.0, %v773
        %v775 = vpop.f32.mrf.mxu0
        %776 = vmatprep.mubr.bf16.mxu0 0
        %777 = vmatmul.mubr.bf16.gmra.mxu0 %v380
        %v778 = vpop.f32.mrf.mxu0
        %v779 = vadd.f32 0.0, %v778
        %v780 = vpop.f32.mrf.mxu0
        %v781 = vpop.f32.mrf.mxu0
        %v782 = vadd.f32 0.0, %v781
        %v783 = vpop.f32.mrf.mxu0
        %784 = vmatprep.mubr.bf16.mxu0 0
        %785 = vmatmul.mubr.bf16.gmra.mxu0 %v381
        %v786 = vpop.f32.mrf.mxu0
        %v787 = vadd.f32 0.0, %v786
        %v788 = vpop.f32.mrf.mxu0
        %v789 = vpop.f32.mrf.mxu0
        %v790 = vadd.f32 0.0, %v789
        %v791 = vpop.f32.mrf.mxu0
        %792 = vmatprep.mubr.bf16.mxu0 0
        %793 = vmatmul.mubr.bf16.gmra.mxu0 %v382
        %v794 = vpop.f32.mrf.mxu0
        %v795 = vadd.f32 0.0, %v794
        %v796 = vpop.f32.mrf.mxu0
        %v797 = vpop.f32.mrf.mxu0
        %v798 = vadd.f32 0.0, %v797
        %v799 = vpop.f32.mrf.mxu0
        %800 = vdwg.mxu0
        %v801 = vpack.c.bf16 %v742, %v739
        %v802 = vpack.c.bf16 %v750, %v747
        %v803 = vpack.c.bf16 %v758, %v755
        %v804 = vpack.c.bf16 %v766, %v763
        %v805 = vpack.c.bf16 %v774, %v771
        %v806 = vpack.c.bf16 %v782, %v779
        %v807 = vpack.c.bf16 %v790, %v787
        %v808 = vpack.c.bf16 %v798, %v795
        %v817 = vunpack.c.l.b16 %v801
        %v818 = vunpack.c.h.b16 %v801
        %v819 = vunpack.c.l.b16 %v802
        %v820 = vunpack.c.h.b16 %v802
        %v821 = vunpack.c.l.b16 %v803
        %v822 = vunpack.c.h.b16 %v803
        %v823 = vunpack.c.l.b16 %v804
        %v824 = vunpack.c.h.b16 %v804
        %v825 = vunpack.c.l.b16 %v805
        %v826 = vunpack.c.h.b16 %v805
        %v827 = vunpack.c.l.b16 %v806
        %v828 = vunpack.c.h.b16 %v806
        %v829 = vunpack.c.l.b16 %v807
        %v830 = vunpack.c.h.b16 %v807
        %v831 = vunpack.c.l.b16 %v808
        %v832 = vunpack.c.h.b16 %v808
        %v833 = vpack.c.b16 %v817, %v817
        %v834 = vpack.c.b16 %v818, %v818
        %v835 = vpack.c.b16 %v819, %v819
        %v836 = vpack.c.b16 %v820, %v820
        %v837 = vpack.c.b16 %v821, %v821
        %v838 = vpack.c.b16 %v822, %v822
        %v839 = vpack.c.b16 %v823, %v823
        %v840 = vpack.c.b16 %v824, %v824
        %v841 = vpack.c.b16 %v825, %v825
        %v842 = vpack.c.b16 %v826, %v826
        %v843 = vpack.c.b16 %v827, %v827
        %v844 = vpack.c.b16 %v828, %v828
        %v845 = vpack.c.b16 %v829, %v829
        %v846 = vpack.c.b16 %v830, %v830
        %v847 = vpack.c.b16 %v831, %v831
        %v848 = vpack.c.b16 %v832, %v832
        %865 = vst [vmem:[%s346] sm:$0xf] %v833
        %866 = vst [vmem:[%s346 + $0x4] sm:$0xf] %v834
        %867 = vst [vmem:[%s346 + $0x8] sm:$0xf] %v835
        %868 = vst [vmem:[%s346 + $0xc] sm:$0xf] %v836
        %869 = vst [vmem:[%s346 + $0x10] sm:$0xf] %v837
        %870 = vst [vmem:[%s346 + $0x14] sm:$0xf] %v838
        %871 = vst [vmem:[%s346 + $0x18] sm:$0xf] %v839
        %872 = vst [vmem:[%s346 + $0x1c] sm:$0xf] %v840
        %873 = vst [vmem:[%s346 + $0x20] sm:$0xf] %v841
        %874 = vst [vmem:[%s346 + $0x24] sm:$0xf] %v842
        %875 = vst [vmem:[%s346 + $0x28] sm:$0xf] %v843
        %876 = vst [vmem:[%s346 + $0x2c] sm:$0xf] %v844
        %877 = vst [vmem:[%s346 + $0x30] sm:$0xf] %v845
        %878 = vst [vmem:[%s346 + $0x34] sm:$0xf] %v846
        %879 = vst [vmem:[%s346 + $0x38] sm:$0xf] %v847
        %880 = vst [vmem:[%s346 + $0x3c] sm:$0xf] %v848
        %v881 = vld [vmem:[#allocation8] sm:$0xf]
        %v882 = vld [vmem:[#allocation8 + $0x4] sm:$0xf]
        %v883 = vld [vmem:[#allocation8 + $0x8] sm:$0xf]
        %v884 = vld [vmem:[#allocation8 + $0xc] sm:$0xf]
        %v885 = vld [vmem:[#allocation8 + $0x10] sm:$0xf]
        %v886 = vld [vmem:[#allocation8 + $0x14] sm:$0xf]
        %v887 = vld [vmem:[#allocation8 + $0x18] sm:$0xf]
        %v888 = vld [vmem:[#allocation8 + $0x1c] sm:$0xf]
        %v889 = vld [vmem:[#allocation8 + $0x20] sm:$0xf]
        %v890 = vld [vmem:[#allocation8 + $0x24] sm:$0xf]
        %v891 = vld [vmem:[#allocation8 + $0x28] sm:$0xf]
        %v892 = vld [vmem:[#allocation8 + $0x2c] sm:$0xf]
        %v893 = vld [vmem:[#allocation8 + $0x30] sm:$0xf]
        %v894 = vld [vmem:[#allocation8 + $0x34] sm:$0xf]
        %v895 = vld [vmem:[#allocation8 + $0x38] sm:$0xf]
        %v896 = vld [vmem:[#allocation8 + $0x3c] sm:$0xf]
        %v913 = vunpack.c.l.b16 %v881
        %v914 = vunpack.c.l.b16 %v882
        %v915 = vunpack.c.l.b16 %v883
        %v916 = vunpack.c.l.b16 %v884
        %v917 = vunpack.c.l.b16 %v885
        %v918 = vunpack.c.l.b16 %v886
        %v919 = vunpack.c.l.b16 %v887
        %v920 = vunpack.c.l.b16 %v888
        %v921 = vunpack.c.l.b16 %v889
        %v922 = vunpack.c.l.b16 %v890
        %v923 = vunpack.c.l.b16 %v891
        %v924 = vunpack.c.l.b16 %v892
        %v925 = vunpack.c.l.b16 %v893
        %v926 = vunpack.c.l.b16 %v894
        %v927 = vunpack.c.l.b16 %v895
        %v928 = vunpack.c.l.b16 %v896
        %v929 = vpack.c.b16 %v914, %v913
        %v930 = vpack.c.b16 %v916, %v915
        %v931 = vpack.c.b16 %v918, %v917
        %v932 = vpack.c.b16 %v920, %v919
        %v933 = vpack.c.b16 %v922, %v921
        %v934 = vpack.c.b16 %v924, %v923
        %v935 = vpack.c.b16 %v926, %v925
        %v936 = vpack.c.b16 %v928, %v927
        %945 = vmatprep.subr.bf16.mxu0 0
        %946 = vmatpush1.bf16.msra.mxu0 %v936
        %947 = vmatprep.subr.bf16.mxu0 0
        %948 = vmatpush1.bf16.msra.mxu0 %v935
        %949 = vmatprep.subr.bf16.mxu0 0
        %950 = vmatpush1.bf16.msra.mxu0 %v934
        %951 = vmatprep.subr.bf16.mxu0 0
        %952 = vmatpush1.bf16.msra.mxu0 %v933
        %953 = vmatprep.subr.bf16.mxu0 0
        %954 = vmatpush1.bf16.msra.mxu0 %v932
        %955 = vmatprep.subr.bf16.mxu0 0
        %956 = vmatpush1.bf16.msra.mxu0 %v931
        %957 = vmatprep.subr.bf16.mxu0 0
        %958 = vmatpush1.bf16.msra.mxu0 %v930
        %959 = vmatprep.subr.bf16.mxu0 0
        %960 = vmatpush1.bf16.msra.mxu0 %v929
        %961 = vmatprep.subr.bf16.mxu0 0
        %962 = vmatpush2.bf16.msra.mxu0 0
        %963 = vmatprep.subr.bf16.mxu0 0
        %964 = vmatpush2.bf16.msra.mxu0 0
        %965 = vmatprep.subr.bf16.mxu0 0
        %966 = vmatpush2.bf16.msra.mxu0 0
        %967 = vmatprep.subr.bf16.mxu0 0
        %968 = vmatpush2.bf16.msra.mxu0 0
        %969 = vmatprep.subr.bf16.mxu0 0
        %970 = vmatpush2.bf16.msra.mxu0 0
        %971 = vmatprep.subr.bf16.mxu0 0
        %972 = vmatpush2.bf16.msra.mxu0 0
        %973 = vmatprep.subr.bf16.mxu0 0
        %974 = vmatpush2.bf16.msra.mxu0 0
        %975 = vmatprep.subr.bf16.mxu0 0
        %976 = vmatpush2.bf16.msra.mxu0 0
        %977 = vmatprep.mubr.bf16.mxu0 0
        %978 = vmatmul.mubr.bf16.gmra.mxu0 %v375
        %v979 = vpop.f32.mrf.mxu0
        %v980 = vadd.f32 0.0, %v979
        %v981 = vpop.f32.mrf.mxu0
        %v982 = vpop.f32.mrf.mxu0
        %v983 = vadd.f32 0.0, %v982
        %v984 = vpop.f32.mrf.mxu0
        %985 = vmatprep.mubr.bf16.mxu0 0
        %986 = vmatmul.mubr.bf16.gmra.mxu0 %v376
        %v987 = vpop.f32.mrf.mxu0
        %v988 = vadd.f32 0.0, %v987
        %v989 = vpop.f32.mrf.mxu0
        %v990 = vpop.f32.mrf.mxu0
        %v991 = vadd.f32 0.0, %v990
        %v992 = vpop.f32.mrf.mxu0
        %993 = vmatprep.mubr.bf16.mxu0 0
        %994 = vmatmul.mubr.bf16.gmra.mxu0 %v377
        %v995 = vpop.f32.mrf.mxu0
        %v996 = vadd.f32 0.0, %v995
        %v997 = vpop.f32.mrf.mxu0
        %v998 = vpop.f32.mrf.mxu0
        %v999 = vadd.f32 0.0, %v998
        %v1000 = vpop.f32.mrf.mxu0
        %1001 = vmatprep.mubr.bf16.mxu0 0
        %1002 = vmatmul.mubr.bf16.gmra.mxu0 %v378
        %v1003 = vpop.f32.mrf.mxu0
        %v1004 = vadd.f32 0.0, %v1003
        %v1005 = vpop.f32.mrf.mxu0
        %v1006 = vpop.f32.mrf.mxu0
        %v1007 = vadd.f32 0.0, %v1006
        %v1008 = vpop.f32.mrf.mxu0
        %1009 = vmatprep.mubr.bf16.mxu0 0
        %1010 = vmatmul.mubr.bf16.gmra.mxu0 %v379
        %v1011 = vpop.f32.mrf.mxu0
        %v1012 = vadd.f32 0.0, %v1011
        %v1013 = vpop.f32.mrf.mxu0
        %v1014 = vpop.f32.mrf.mxu0
        %v1015 = vadd.f32 0.0, %v1014
        %v1016 = vpop.f32.mrf.mxu0
        %1017 = vmatprep.mubr.bf16.mxu0 0
        %1018 = vmatmul.mubr.bf16.gmra.mxu0 %v380
        %v1019 = vpop.f32.mrf.mxu0
        %v1020 = vadd.f32 0.0, %v1019
        %v1021 = vpop.f32.mrf.mxu0
        %v1022 = vpop.f32.mrf.mxu0
        %v1023 = vadd.f32 0.0, %v1022
        %v1024 = vpop.f32.mrf.mxu0
        %1025 = vmatprep.mubr.bf16.mxu0 0
        %1026 = vmatmul.mubr.bf16.gmra.mxu0 %v381
        %v1027 = vpop.f32.mrf.mxu0
        %v1028 = vadd.f32 0.0, %v1027
        %v1029 = vpop.f32.mrf.mxu0
        %v1030 = vpop.f32.mrf.mxu0
        %v1031 = vadd.f32 0.0, %v1030
        %v1032 = vpop.f32.mrf.mxu0
        %1033 = vmatprep.mubr.bf16.mxu0 0
        %1034 = vmatmul.mubr.bf16.gmra.mxu0 %v382
        %v1035 = vpop.f32.mrf.mxu0
        %v1036 = vadd.f32 0.0, %v1035
        %v1037 = vpop.f32.mrf.mxu0
        %v1038 = vpop.f32.mrf.mxu0
        %v1039 = vadd.f32 0.0, %v1038
        %v1040 = vpop.f32.mrf.mxu0
        %1041 = vdwg.mxu0
        %v1042 = vpack.c.bf16 %v983, %v980
        %v1043 = vpack.c.bf16 %v991, %v988
        %v1044 = vpack.c.bf16 %v999, %v996
        %v1045 = vpack.c.bf16 %v1007, %v1004
        %v1046 = vpack.c.bf16 %v1015, %v1012
        %v1047 = vpack.c.bf16 %v1023, %v1020
        %v1048 = vpack.c.bf16 %v1031, %v1028
        %v1049 = vpack.c.bf16 %v1039, %v1036
        %v1058 = vunpack.c.l.b16 %v1042
        %v1059 = vunpack.c.h.b16 %v1042
        %v1060 = vunpack.c.l.b16 %v1043
        %v1061 = vunpack.c.h.b16 %v1043
        %v1062 = vunpack.c.l.b16 %v1044
        %v1063 = vunpack.c.h.b16 %v1044
        %v1064 = vunpack.c.l.b16 %v1045
        %v1065 = vunpack.c.h.b16 %v1045
        %v1066 = vunpack.c.l.b16 %v1046
        %v1067 = vunpack.c.h.b16 %v1046
        %v1068 = vunpack.c.l.b16 %v1047
        %v1069 = vunpack.c.h.b16 %v1047
        %v1070 = vunpack.c.l.b16 %v1048
        %v1071 = vunpack.c.h.b16 %v1048
        %v1072 = vunpack.c.l.b16 %v1049
        %v1073 = vunpack.c.h.b16 %v1049
        %v1074 = vpack.c.b16 %v1058, %v1058
        %v1075 = vpack.c.b16 %v1059, %v1059
        %v1076 = vpack.c.b16 %v1060, %v1060
        %v1077 = vpack.c.b16 %v1061, %v1061
        %v1078 = vpack.c.b16 %v1062, %v1062
        %v1079 = vpack.c.b16 %v1063, %v1063
        %v1080 = vpack.c.b16 %v1064, %v1064
        %v1081 = vpack.c.b16 %v1065, %v1065
        %v1082 = vpack.c.b16 %v1066, %v1066
        %v1083 = vpack.c.b16 %v1067, %v1067
        %v1084 = vpack.c.b16 %v1068, %v1068
        %v1085 = vpack.c.b16 %v1069, %v1069
        %v1086 = vpack.c.b16 %v1070, %v1070
        %v1087 = vpack.c.b16 %v1071, %v1071
        %v1088 = vpack.c.b16 %v1072, %v1072
        %v1089 = vpack.c.b16 %v1073, %v1073
        %1106 = vst [vmem:[%s353] sm:$0xf] %v1074
        %1107 = vst [vmem:[%s353 + $0x4] sm:$0xf] %v1075
        %1108 = vst [vmem:[%s353 + $0x8] sm:$0xf] %v1076
        %1109 = vst [vmem:[%s353 + $0xc] sm:$0xf] %v1077
        %1110 = vst [vmem:[%s353 + $0x10] sm:$0xf] %v1078
        %1111 = vst [vmem:[%s353 + $0x14] sm:$0xf] %v1079
        %1112 = vst [vmem:[%s353 + $0x18] sm:$0xf] %v1080
        %1113 = vst [vmem:[%s353 + $0x1c] sm:$0xf] %v1081
        %1114 = vst [vmem:[%s353 + $0x20] sm:$0xf] %v1082
        %1115 = vst [vmem:[%s353 + $0x24] sm:$0xf] %v1083
        %1116 = vst [vmem:[%s353 + $0x28] sm:$0xf] %v1084
        %1117 = vst [vmem:[%s353 + $0x2c] sm:$0xf] %v1085
        %1118 = vst [vmem:[%s353 + $0x30] sm:$0xf] %v1086
        %1119 = vst [vmem:[%s353 + $0x34] sm:$0xf] %v1087
        %1120 = vst [vmem:[%s353 + $0x38] sm:$0xf] %v1088
        %1121 = vst [vmem:[%s353 + $0x3c] sm:$0xf] %v1089
        %s1122 = sand.u32 %s142, 1
        %s1123 = scalar_lea.sflag [#allocation4], %s1122
        %s1124 = sand.u32 %s142, 1
        %s1125 = smul.addr %s1124, 64
        %s1126 = scalar_lea.vmem [#allocation10], %s1125
        %s1127 = sand.u32 %s29, 1
        %s1128 = scalar_lea.sflag [#allocation12], %s1127
        %s1129 = sand.u32 %s170, 1
        %s1130 = smul.addr %s1129, 64
        %s1131 = scalar_lea.vmem [#allocation11], %s1130
        %s1132 = sand.u32 %s29, 1
        %s1133 = scalar_lea.sflag [#allocation12], %s1132
        %s1134 = sand.u32 %s198, 1
        %s1135 = smul.addr %s1134, 64
        %s1136 = scalar_lea.vmem [#allocation13], %s1135
        // Predicated region
        $region53: #{tpu_custom_call.1} parent=35 // pred_check
          %p1137 = pneg %p152
        $region54: #{tpu_custom_call.1} parent=35 // pred_check_branch
          %1139 = sbr.rel (%p1137) target = $region56
        $region55: #{tpu_custom_call.1} parent=35 // pred_region
          %s1140 = smul.u32 16, %s34
          %s1142 = ssub.s32 1024, 1024
          %1143 = vsyncadd %s1123, %s1142
          %s1144 = smul.addr %s33, 16
          %s1145 = sadd.s32 %s1140, %s1144
          %s1146 = smul.addr %s1145, 64
          %s1147 = scalar_lea.hbm %s4, %s1146
          %s1148 = sshll.u32 %s1126, 4
          %s1149 = int_to_ptr.vmem [resolvable:$true] %s1148
          %1154 = dma.vmem_to_hbm [thread:$0]  %s1149, 1024, %s1147, %s1123, 64, 64, 4
        $region56: #{tpu_custom_call.1} parent=35 // pred_fallthru
          _
        // Predicated region
        $region57: #{tpu_custom_call.1} parent=35 // pred_check
          %p1155 = pneg %p180
        $region58: #{tpu_custom_call.1} parent=35 // pred_check_branch
          %1157 = sbr.rel (%p1155) target = $region60
        $region59: #{tpu_custom_call.1} parent=35 // pred_region
          %s1158 = smul.u32 16, %s34
          %s1160 = ssub.s32 1024, 1024
          %1161 = vsyncadd %s1128, %s1160
          %s1162 = smul.addr %s33, 16
          %s1163 = sadd.s32 %s1158, %s1162
          %s1164 = smul.addr %s1163, 64
          %s1165 = scalar_lea.hbm %s5, %s1164
          %s1166 = sshll.u32 %s1131, 4
          %s1167 = int_to_ptr.vmem [resolvable:$true] %s1166
          %1172 = dma.vmem_to_hbm [thread:$0]  %s1167, 1024, %s1165, %s1128, 64, 64, 4
        $region60: #{tpu_custom_call.1} parent=35 // pred_fallthru
          _
        // Predicated region
        $region61: #{tpu_custom_call.1} parent=35 // pred_check
          %p1173 = pneg %p208
        $region62: #{tpu_custom_call.1} parent=35 // pred_check_branch
          %1175 = sbr.rel (%p1173) target = $region64
        $region63: #{tpu_custom_call.1} parent=35 // pred_region
          %s1176 = smul.u32 16, %s34
          %s1178 = ssub.s32 1024, 1024
          %1179 = vsyncadd %s1133, %s1178
          %s1180 = smul.addr %s33, 16
          %s1181 = sadd.s32 %s1176, %s1180
          %s1182 = smul.addr %s1181, 64
          %s1183 = scalar_lea.hbm %s6, %s1182
          %s1184 = sshll.u32 %s1136, 4
          %s1185 = int_to_ptr.vmem [resolvable:$true] %s1184
          %1190 = dma.vmem_to_hbm [thread:$0]  %s1185, 1024, %s1183, %s1133, 64, 64, 4
        $region64: #{tpu_custom_call.1} parent=35 // pred_fallthru
          _
      $region36: #{tpu_custom_call.1} parent=5 // pred_fallthru
        _
      %p1191 = scmp.le.s32.totalorder 2, %s24
      // Predicated region
      $region65: #{tpu_custom_call.1} parent=5 // pred_check
        %p1192 = pneg %p1191
      $region66: #{tpu_custom_call.1} parent=5 // pred_check_branch
        %1194 = sbr.rel (%p1192) target = $region68
      $region67: #{tpu_custom_call.1} parent=5 // pred_region
        %s1195 = ssub.s32 %s24, 2
        // Predicated region
        $region69: #{tpu_custom_call.1} parent=67 // pred_check
          %p1196 = pneg %p158
        $region70: #{tpu_custom_call.1} parent=67 // pred_check_branch
          %1198 = sbr.rel (%p1196) target = $region72
        $region71: #{tpu_custom_call.1} parent=67 // pred_region
          %s1199 = sand.u32 %s143, 1
          %s1200 = scalar_lea.sflag [#allocation4], %s1199
          %s1201 = sand.u32 %s143, 1
          %s1202 = smul.addr %s1201, 64
          %s1203 = scalar_lea.vmem [#allocation10], %s1202
          %1204 = dma.done %s1200, 1024
        $region72: #{tpu_custom_call.1} parent=67 // pred_fallthru
          _
        // Predicated region
        $region73: #{tpu_custom_call.1} parent=67 // pred_check
          %p1205 = pneg %p186
        $region74: #{tpu_custom_call.1} parent=67 // pred_check_branch
          %1207 = sbr.rel (%p1205) target = $region76
        $region75: #{tpu_custom_call.1} parent=67 // pred_region
          %s1208 = sand.u32 %s30, 1
          %s1209 = scalar_lea.sflag [#allocation12], %s1208
          %s1210 = sand.u32 %s171, 1
          %s1211 = smul.addr %s1210, 64
          %s1212 = scalar_lea.vmem [#allocation11], %s1211
          %1213 = dma.done %s1209, 1024
        $region76: #{tpu_custom_call.1} parent=67 // pred_fallthru
          _
        // Predicated region
        $region77: #{tpu_custom_call.1} parent=67 // pred_check
          %p1214 = pneg %p214
        $region78: #{tpu_custom_call.1} parent=67 // pred_check_branch
          %1216 = sbr.rel (%p1214) target = $region80
        $region79: #{tpu_custom_call.1} parent=67 // pred_region
          %s1217 = sand.u32 %s30, 1
          %s1218 = scalar_lea.sflag [#allocation12], %s1217
          %s1219 = sand.u32 %s199, 1
          %s1220 = smul.addr %s1219, 64
          %s1221 = scalar_lea.vmem [#allocation13], %s1220
          %1222 = dma.done %s1218, 1024
        $region80: #{tpu_custom_call.1} parent=67 // pred_fallthru
          _
      $region68: #{tpu_custom_call.1} parent=5 // pred_fallthru
        _
    $region6: #{tpu_custom_call.1} parent=1 // loop_footer
      %s28 = sadd.s32 1, %s24
    $region7: #{tpu_custom_call.1} parent=1 // loop_footer_branch
      %23 = sbr.rel target = $region3
    $region8: #{tpu_custom_call.1} parent=1 // loop_exit
      _
    %1223 = vsyncpa [#allocation3], 1
    %s1224 = scalar_lea.sflag [#allocation3], 1
    %1225 = vsyncpa %s1224, 1
    %1226 = vsyncpa [#allocation6], 1
    %1227 = vsyncpa [#allocation9], 1
    %1228 = vsyncpa [#allocation4], 1
    %s1229 = scalar_lea.sflag [#allocation4], 1
    %1230 = vsyncpa %s1229, 1
    %1231 = vsyncpa [#allocation12], 1
    %s1232 = scalar_lea.sflag [#allocation12], 1
    %1233 = vsyncpa %s1232, 1

</llo_original>
